<compile_context>
chip_gen: v5e
topology: v5e:2x2
jax: 0.10.0
libtpu: 0.0.40
codegen_flags: <defaults>
</compile_context>

<pallas_src>
import functools

import jax
import jax.numpy as jnp
from jax.experimental import pallas as pl
from jax.experimental.pallas import tpu as pltpu

LANE = 128      # TPU lane width: channel dims are zero-padded to this.
TILE_M = 512    # A_hat row tile (output rows per grid step).
TILE_K = 1024   # A_hat contraction tile (columns per grid step).
# VMEM use per layer call at 512x1024 bf16 tiles: ~2 MiB (A, double-buffered)
# + 0.5 MiB (Z) + 0.5 MiB (out) + 0.25 MiB (acc)  ->  well under default limits
# on every generation; the A-tile size is chosen for step-count/roofline reasons,
# not VMEM.


def _round_up(x, m):
    return ((x + m - 1) // m) * m


def _num_layers(depth):
    # Mirrors the torch forward: conv1 always, conv2 if depth >= 2, conv3 if depth == 3.
    return 1 + (1 if depth >= 2 else 0) + (1 if depth == 3 else 0)


def _choose_tiles(n):
    """Pick (n_pad, tile_m, tile_k) with tile_m | n_pad and tile_k | n_pad, all
    multiples of 128 (satisfying the (8,128) block constraint)."""
    n128 = _round_up(n, LANE)
    if n128 <= TILE_M:
        return n128, n128, n128          # single tile covers the whole graph
    n_pad = _round_up(n128, TILE_M)
    tile_k = TILE_K if n_pad % TILE_K == 0 else TILE_M
    return n_pad, TILE_M, tile_k


# -----------------------------------------------------------------------------------
# Per-layer Pallas kernel: grid = (row tile i, contraction tile k)
#
#   acc[i]  = sum_k A_hat[i, k] @ Z[k]        (MXU, f32 accumulate)
#   out[i]  = PReLU(acc[i] + b, alpha)        (VPU, f32 epilogue, lane-dense store)
# -----------------------------------------------------------------------------------
def _gcn_prelu_kernel(a_ref, z_ref, b_ref, alpha_ref, o_ref, acc_ref):
    k = pl.program_id(1)

    @pl.when(k == 0)
    def _():
        acc_ref[...] = jnp.zeros_like(acc_ref)

    acc_ref[...] += jnp.dot(a_ref[...], z_ref[...],
                            preferred_element_type=jnp.float32)

    @pl.when(k == pl.num_programs(1) - 1)
    def _():
        t = acc_ref[...] + b_ref[...]                     # (tile_m, Cp) f32
        o_ref[...] = jnp.where(t >= 0.0, t, alpha_ref[...] * t)   # per-channel PReLU


def _gcn_prelu_layer(a_hat_bf16, z_bf16, b, alpha, *, tile_m, tile_k):
    n_pad = a_hat_bf16.shape[0]
    cp = z_bf16.shape[1]
    grid = (n_pad // tile_m, n_pad // tile_k)
    return pl.pallas_call(
        _gcn_prelu_kernel,
        out_shape=jax.ShapeDtypeStruct((n_pad, cp), jnp.float32),
        grid_spec=pltpu.PrefetchScalarGridSpec(
            num_scalar_prefetch=0,
            grid=grid,
            in_specs=[
                # A_hat tile: bf16, streamed, auto double-buffered.
                pl.BlockSpec((tile_m, tile_k), lambda i, k: (i, k)),
                # Projected features Z chunk along the contraction axis.
                pl.BlockSpec((tile_k, cp), lambda i, k: (k, 0)),
                pl.BlockSpec((1, cp), lambda i, k: (0, 0)),   # bias
                pl.BlockSpec((1, cp), lambda i, k: (0, 0)),   # PReLU alpha
            ],
            out_specs=pl.BlockSpec((tile_m, cp), lambda i, k: (i, 0)),
            scratch_shapes=[pltpu.VMEM((tile_m, cp), jnp.float32)],  # f32 accumulator
        ),
        compiler_params=pltpu.CompilerParams(
            # Row tiles are independent -> megacore sharding on v7x's 2 TCs;
            # k is the reduction axis (accumulator revisits the same out block).
            dimension_semantics=("parallel", "arbitrary"),
        ),
    )(a_hat_bf16, z_bf16, b, alpha)


# -----------------------------------------------------------------------------------
# Plain-JAX glue
# -----------------------------------------------------------------------------------
def precompute_normalized_adjacency(edge_index, edge_weight, num_nodes, n_pad):
    """Dense GCN-normalized adjacency (PyG gcn_norm: self loops, D^-1/2 (A+I) D^-1/2),
    zero-padded to n_pad. For a static graph compute this ONCE and reuse it."""
    src, dst = edge_index[0], edge_index[1]
    loop = jnp.arange(num_nodes, dtype=edge_index.dtype)
    src = jnp.concatenate([src, loop])
    dst = jnp.concatenate([dst, loop])
    ew = jnp.concatenate([edge_weight, jnp.ones((num_nodes,), edge_weight.dtype)])

    deg = jnp.zeros((num_nodes,), edge_weight.dtype).at[dst].add(ew)
    dinv = jnp.where(deg > 0, jax.lax.rsqrt(deg), 0.0)
    norm = dinv[dst] * ew * dinv[src]

    # A_hat[i, j] = norm of edge j -> i ; padded rows/cols are exactly zero.
    a_hat = jnp.zeros((n_pad, n_pad), jnp.float32).at[dst, src].add(norm)
    return a_hat


@functools.partial(jax.jit, static_argnames=("depth", "tile_m", "tile_k"))
def _encoder_apply(params, x, a_hat_bf16, depth, tile_m, tile_k):
    n, _ = x.shape
    hidden = params[0][0].shape[1]
    cp = _round_up(hidden, LANE)
    n_pad = a_hat_bf16.shape[0]
    n_layers = _num_layers(depth)

    def pad_c(v):                       # (r, c) -> (r, cp) zero-pad on channels
        return jnp.pad(v, ((0, 0), (0, cp - v.shape[1])))

    h = jnp.pad(x, ((0, n_pad - n), (0, 0)))      # (n_pad, Cin) f32, H_0
    for l in range(n_layers):
        w, b, alpha = params[l]
        # Feature projection in plain XLA: (n_pad, C) @ (C, hidden) is <1% of the N^2
        # aggregation cost (and layer 0's Cin=4 contraction is a poor MXU shape).
        z = pad_c(jnp.dot(h, w)).astype(jnp.bfloat16)            # (n_pad, cp) bf16
        h_full = _gcn_prelu_layer(a_hat_bf16, z, pad_c(b), pad_c(alpha),
                                  tile_m=tile_m, tile_k=tile_k)  # (n_pad, cp) f32
        # Padded rows only ever hold PReLU(bias); they never contaminate real rows
        # because A_hat's padded columns are zero, and they are sliced off below.
        # Padded channels stay exactly zero (zero W/b/alpha padding).
        h = h_full[:, :hidden]
    return h[:n]


def encoder_forward(params, x, edge_index, edge_weight, depth):
    n = x.shape[0]
    n_pad, tile_m, tile_k = _choose_tiles(n)
    # For a static graph this densification should be hoisted out of the step and the
    # bf16 A_hat reused across forward passes.
    a_hat = precompute_normalized_adjacency(edge_index, edge_weight, n, n_pad)
    return _encoder_apply(params, x, a_hat.astype(jnp.bfloat16), depth=depth,
                          tile_m=tile_m, tile_k=tile_k)


# -----------------------------------------------------------------------------------
# Parameter init (GCNConv glorot weight / zero bias, PReLU(hidden) slope 0.25)
# -----------------------------------------------------------------------------------
def init_encoder_params(key, in_channels, hidden_channels, depth=3):
    params = []
    dims = [(in_channels, hidden_channels)] + [(hidden_channels, hidden_channels)] * 2
    for d_in, d_out in dims:
        key, sub = jax.random.split(key)
        limit = jnp.sqrt(6.0 / (d_in + d_out))
        w = jax.random.uniform(sub, (d_in, d_out), jnp.float32, -limit, limit)
        b = jnp.zeros((1, d_out), jnp.float32)
        alpha = jnp.full((1, d_out), 0.25, jnp.float32)
        params.append((w, b, alpha))
    return params


def encoder_reference(params, x, edge_index, edge_weight, depth):
    """Pure-JAX f32 reference with identical semantics (for a sanity check)."""
    n = x.shape[0]
    a = precompute_normalized_adjacency(edge_index, edge_weight, n, n)
    h = x
    for l in range(_num_layers(depth)):
        w, b, alpha = params[l]
        z = a @ (h @ w) + b
        h = jnp.where(z >= 0, z, alpha * z)
    return h


if __name__ == "__main__":
    key = jax.random.PRNGKey(0)

    num_nodes = 16
    in_channels = 4
    hidden_channels = 32
    depth = 3

    # Node features
    key, kx = jax.random.split(key)
    x = jax.random.normal(kx, (num_nodes, in_channels), jnp.float32)

    # Simple deterministic bidirectional ring graph
    fwd = jnp.stack([jnp.arange(num_nodes), (jnp.arange(num_nodes) + 1) % num_nodes])
    bwd = jnp.stack([(jnp.arange(num_nodes) + 1) % num_nodes, jnp.arange(num_nodes)])
    edge_index = jnp.concatenate([fwd, bwd], axis=1).astype(jnp.int32)   # [2, 2N]
    key, ke = jax.random.split(key)
    edge_weight = jax.random.uniform(ke, (edge_index.shape[1],), jnp.float32, 0.5, 1.5)

    params = init_encoder_params(key, in_channels, hidden_channels, depth)

    out = encoder_forward(params, x, edge_index, edge_weight, depth)
    out = jax.block_until_ready(out)
    assert out.shape == (num_nodes, hidden_channels)

    # Loose sanity check vs. f32 reference (kernel feeds A_hat / Z to the MXU in bf16).
    ref = encoder_reference(params, x, edge_index, edge_weight, depth)
    max_err = float(jnp.max(jnp.abs(out - ref)))
    tol = 5e-2 * (float(jnp.max(jnp.abs(ref))) + 1.0)
    assert max_err < tol, f"mismatch vs reference: {max_err} (tol {tol})"

    print("KERNEL_OK")
</pallas_src>

<mosaic_0001>
module attributes {stable_mosaic.version = 11 : i64} {
  func.func @_gcn_prelu_kernel(%arg0: i32, %arg1: i32, %arg2: memref<128x128xbf16, #tpu.memory_space<vmem>>, %arg3: memref<128x128xbf16, #tpu.memory_space<vmem>>, %arg4: memref<1x128xf32, #tpu.memory_space<vmem>>, %arg5: memref<1x128xf32, #tpu.memory_space<vmem>>, %arg6: memref<128x128xf32, #tpu.memory_space<vmem>>, %arg7: memref<128x128xf32, #tpu.memory_space<vmem>>) attributes {dimension_semantics = [#tpu.dimension_semantics<parallel>, #tpu.dimension_semantics<arbitrary>], iteration_bounds = array<i64: 1, 1>, scalar_prefetch = 0 : i64, scratch_operands = 1 : i64, tpu.core_type = #tpu.core_type<tc>, window_params = [{transform_indices = @transform_0, window_bounds = array<i64: 128, 128>}, {transform_indices = @transform_1, window_bounds = array<i64: 128, 128>}, {pipeline_mode = #tpu.pipeline_mode<synchronous>, transform_indices = @transform_2, window_bounds = array<i64: 1, 128>}, {pipeline_mode = #tpu.pipeline_mode<synchronous>, transform_indices = @transform_3, window_bounds = array<i64: 1, 128>}, {transform_indices = @transform_4, window_bounds = array<i64: 128, 128>}]} {
    %c0_i32 = arith.constant 0 : i32
    %0 = arith.cmpi eq, %arg1, %c0_i32 : i32
    %1 = arith.extui %0 : i1 to i32
    %c0_i32_0 = arith.constant 0 : i32
    %2 = arith.cmpi ne, %1, %c0_i32_0 : i32
    scf.if %2 {
      %cst_10 = arith.constant 0.000000e+00 : f32
      %12 = vector.broadcast %cst_10 : f32 to vector<128x128xf32>
      %c0_11 = arith.constant 0 : index
      %c0_12 = arith.constant 0 : index
      %13 = vector.load %arg7[%c0_11, %c0_12] : memref<128x128xf32, #tpu.memory_space<vmem>>, vector<128x128xf32>
      tpu.vector_store %arg7[%c0_11, %c0_12], %12 {strides = array<i32>} : memref<128x128xf32, #tpu.memory_space<vmem>>, vector<128x128xf32>,
    } else {
    }
    %c0 = arith.constant 0 : index
    %c0_1 = arith.constant 0 : index
    %3 = vector.load %arg7[%c0, %c0_1] : memref<128x128xf32, #tpu.memory_space<vmem>>, vector<128x128xf32>
    %c0_2 = arith.constant 0 : index
    %c0_3 = arith.constant 0 : index
    %4 = vector.load %arg2[%c0_2, %c0_3] : memref<128x128xbf16, #tpu.memory_space<vmem>>, vector<128x128xbf16>
    %c0_4 = arith.constant 0 : index
    %c0_5 = arith.constant 0 : index
    %5 = vector.load %arg3[%c0_4, %c0_5] : memref<128x128xbf16, #tpu.memory_space<vmem>>, vector<128x128xbf16>
    %cst = arith.constant dense<0.000000e+00> : vector<128x128xf32>
    %6 = tpu.matmul %4, %5, %cst {dimension_numbers = #tpu.dot_dimension_numbers<[1], [0], [0], [1], [0, 0, 1, 1], [], []>} : vector<128x128xbf16>, vector<128x128xbf16>, vector<128x128xf32> -> vector<128x128xf32>
    %7 = arith.addf %3, %6 : vector<128x128xf32>
    %c0_6 = arith.constant 0 : index
    %c0_7 = arith.constant 0 : index
    %8 = vector.load %arg7[%c0_6, %c0_7] : memref<128x128xf32, #tpu.memory_space<vmem>>, vector<128x128xf32>
    tpu.vector_store %arg7[%c0_6, %c0_7], %7 {strides = array<i32>} : memref<128x128xf32, #tpu.memory_space<vmem>>, vector<128x128xf32>,
    %c0_i32_8 = arith.constant 0 : i32
    %9 = arith.cmpi eq, %arg1, %c0_i32_8 : i32
    %10 = arith.extui %9 : i1 to i32
    %c0_i32_9 = arith.constant 0 : i32
    %11 = arith.cmpi ne, %10, %c0_i32_9 : i32
    scf.if %11 {
      %c0_10 = arith.constant 0 : index
      %c0_11 = arith.constant 0 : index
      %12 = vector.load %arg7[%c0_10, %c0_11] : memref<128x128xf32, #tpu.memory_space<vmem>>, vector<128x128xf32>
      %c0_12 = arith.constant 0 : index
      %c0_13 = arith.constant 0 : index
      %13 = vector.load %arg4[%c0_12, %c0_13] : memref<1x128xf32, #tpu.memory_space<vmem>>, vector<1x128xf32>
      %14 = vector.broadcast %13 : vector<1x128xf32> to vector<128x128xf32>
      %15 = arith.addf %12, %14 : vector<128x128xf32>
      %cst_14 = arith.constant 0.000000e+00 : f32
      %16 = vector.broadcast %cst_14 : f32 to vector<128x128xf32>
      %17 = arith.cmpf oge, %15, %16 : vector<128x128xf32>
      %c0_15 = arith.constant 0 : index
      %c0_16 = arith.constant 0 : index
      %18 = vector.load %arg5[%c0_15, %c0_16] : memref<1x128xf32, #tpu.memory_space<vmem>>, vector<1x128xf32>
      %19 = vector.broadcast %18 : vector<1x128xf32> to vector<128x128xf32>
      %20 = arith.mulf %19, %15 : vector<128x128xf32>
      %21 = arith.select %17, %15, %20 : vector<128x128xi1>, vector<128x128xf32>
      %c0_17 = arith.constant 0 : index
      %c0_18 = arith.constant 0 : index
      %22 = vector.load %arg6[%c0_17, %c0_18] : memref<128x128xf32, #tpu.memory_space<vmem>>, vector<128x128xf32>
      tpu.vector_store %arg6[%c0_17, %c0_18], %21 {strides = array<i32>} : memref<128x128xf32, #tpu.memory_space<vmem>>, vector<128x128xf32>,
    } else {
    }
    return
  }
  func.func @transform_0(%arg0: i32, %arg1: i32) -> (i32, i32) {
    %c0_i32 = arith.constant 0 : i32
    return %arg0, %arg1 : i32, i32
  }
  func.func @transform_1(%arg0: i32, %arg1: i32) -> (i32, i32) {
    %c0_i32 = arith.constant 0 : i32
    %c0_i32_0 = arith.constant 0 : i32
    return %arg1, %c0_i32 : i32, i32
  }
  func.func @transform_2(%arg0: i32, %arg1: i32) -> (i32, i32) {
    %c0_i32 = arith.constant 0 : i32
    %c0_i32_0 = arith.constant 0 : i32
    %c0_i32_1 = arith.constant 0 : i32
    return %c0_i32, %c0_i32_0 : i32, i32
  }
  func.func @transform_3(%arg0: i32, %arg1: i32) -> (i32, i32) {
    %c0_i32 = arith.constant 0 : i32
    %c0_i32_0 = arith.constant 0 : i32
    %c0_i32_1 = arith.constant 0 : i32
    return %c0_i32, %c0_i32_0 : i32, i32
  }
  func.func @transform_4(%arg0: i32, %arg1: i32) -> (i32, i32) {
    %c0_i32 = arith.constant 0 : i32
    %c0_i32_0 = arith.constant 0 : i32
    return %arg0, %c0_i32 : i32, i32
  }
}

</mosaic_0001>

<llo_original>
// kernel: _encoder_apply.3
$region0: #{_encoder_apply.3}
  #allocation0 [shape = 'u32[]', space=smem, size = 0x4, offset = 0x4, fixed_abs, tag = 'smem constant byte address 0x4 - core index']
  #allocation1 [shape = 'u32[72,128]{1,0:T(1,128)}', space=vmem, size = 0x9000, scoped, tag = 'internal scratch']
  #allocation2 [shape = 'f32[128,128]{1,0:T(8,128)}', space=vmem, size = 0x10000, scoped, tag = 'scratch operand']
  %s0 = inlined_call_operand.vmem [shape: bf16[128,128], index: 0, kind: input, shape index: {}]
  %s1 = inlined_call_operand.vmem [shape: bf16[128,128], index: 1, kind: input, shape index: {}]
  %s2 = inlined_call_operand.vmem [shape: f32[1,128], index: 2, kind: input, shape index: {}]
  %s3 = inlined_call_operand.vmem [shape: f32[1,128], index: 3, kind: input, shape index: {}]
  %s4 = inlined_call_operand.vmem [shape: f32[128,128], index: 4, kind: output, shape index: {}]
  %s5 = sld [smem:[#allocation0]]
  $region34: #{_encoder_apply.3} parent=0
    _
  %s7 = ssub.s32 1, %s5
  %s8 = scalar_select 0, %s7, %s5
  // Predicated region
  $region2: #{_encoder_apply.3} parent=0 // pred_check
    _
  $region3: #{_encoder_apply.3} parent=0 // pred_check_branch
    %10 = sbr.rel (0) target = $region5
  $region4: #{_encoder_apply.3} parent=0 // pred_region
    _
  $region5: #{_encoder_apply.3} parent=0 // pred_fallthru
    _
  // Predicated region
  $region6: #{_encoder_apply.3} parent=0 // pred_check
    _
  $region7: #{_encoder_apply.3} parent=0 // pred_check_branch
    %12 = sbr.rel (0) target = $region9
  $region8: #{_encoder_apply.3} parent=0 // pred_region
    _
  $region9: #{_encoder_apply.3} parent=0 // pred_fallthru
    _
  // Predicated region
  $region10: #{_encoder_apply.3} parent=0 // pred_check
    _
  $region11: #{_encoder_apply.3} parent=0 // pred_check_branch
    %14 = sbr.rel (0) target = $region13
  $region12: #{_encoder_apply.3} parent=0 // pred_region
    _
  $region13: #{_encoder_apply.3} parent=0 // pred_fallthru
    _
  // Predicated region
  $region14: #{_encoder_apply.3} parent=0 // pred_check
    _
  $region15: #{_encoder_apply.3} parent=0 // pred_check_branch
    %16 = sbr.rel (0) target = $region17
  $region16: #{_encoder_apply.3} parent=0 // pred_region
    _
  $region17: #{_encoder_apply.3} parent=0 // pred_fallthru
    _
  %p17 = scmp.eq.s32.totalorder 0, 0
  // Predicated region
  $region18: #{_encoder_apply.3} parent=0 // pred_check
    %p18 = pneg %p17
  $region19: #{_encoder_apply.3} parent=0 // pred_check_branch
    %20 = sbr.rel (%p18) target = $region21
  $region20: #{_encoder_apply.3} parent=0 // pred_region
    %21 = vst [vmem:[#allocation2] sm:$0xff] 0.0
    %22 = vst [vmem:[#allocation2 + $0x8] sm:$0xff] 0.0
    %23 = vst [vmem:[#allocation2 + $0x10] sm:$0xff] 0.0
    %24 = vst [vmem:[#allocation2 + $0x18] sm:$0xff] 0.0
    %25 = vst [vmem:[#allocation2 + $0x20] sm:$0xff] 0.0
    %26 = vst [vmem:[#allocation2 + $0x28] sm:$0xff] 0.0
    %27 = vst [vmem:[#allocation2 + $0x30] sm:$0xff] 0.0
    %28 = vst [vmem:[#allocation2 + $0x38] sm:$0xff] 0.0
    %29 = vst [vmem:[#allocation2 + $0x40] sm:$0xff] 0.0
    %30 = vst [vmem:[#allocation2 + $0x48] sm:$0xff] 0.0
    %31 = vst [vmem:[#allocation2 + $0x50] sm:$0xff] 0.0
    %32 = vst [vmem:[#allocation2 + $0x58] sm:$0xff] 0.0
    %33 = vst [vmem:[#allocation2 + $0x60] sm:$0xff] 0.0
    %34 = vst [vmem:[#allocation2 + $0x68] sm:$0xff] 0.0
    %35 = vst [vmem:[#allocation2 + $0x70] sm:$0xff] 0.0
    %36 = vst [vmem:[#allocation2 + $0x78] sm:$0xff] 0.0
  $region21: #{_encoder_apply.3} parent=0 // pred_fallthru
    _
  %v37 = vld [vmem:[#allocation2] sm:$0xff]
  %v38 = vld [vmem:[#allocation2 + $0x8] sm:$0xff]
  %v39 = vld [vmem:[#allocation2 + $0x10] sm:$0xff]
  %v40 = vld [vmem:[#allocation2 + $0x18] sm:$0xff]
  %v41 = vld [vmem:[#allocation2 + $0x20] sm:$0xff]
  %v42 = vld [vmem:[#allocation2 + $0x28] sm:$0xff]
  %v43 = vld [vmem:[#allocation2 + $0x30] sm:$0xff]
  %v44 = vld [vmem:[#allocation2 + $0x38] sm:$0xff]
  %v45 = vld [vmem:[#allocation2 + $0x40] sm:$0xff]
  %v46 = vld [vmem:[#allocation2 + $0x48] sm:$0xff]
  %v47 = vld [vmem:[#allocation2 + $0x50] sm:$0xff]
  %v48 = vld [vmem:[#allocation2 + $0x58] sm:$0xff]
  %v49 = vld [vmem:[#allocation2 + $0x60] sm:$0xff]
  %v50 = vld [vmem:[#allocation2 + $0x68] sm:$0xff]
  %v51 = vld [vmem:[#allocation2 + $0x70] sm:$0xff]
  %v52 = vld [vmem:[#allocation2 + $0x78] sm:$0xff]
  %v53 = vld [vmem:[%s0] sm:$0xf]
  %v54 = vld [vmem:[%s0 + $0x4] sm:$0xf]
  %v55 = vld [vmem:[%s0 + $0x8] sm:$0xf]
  %v56 = vld [vmem:[%s0 + $0xc] sm:$0xf]
  %v57 = vld [vmem:[%s0 + $0x10] sm:$0xf]
  %v58 = vld [vmem:[%s0 + $0x14] sm:$0xf]
  %v59 = vld [vmem:[%s0 + $0x18] sm:$0xf]
  %v60 = vld [vmem:[%s0 + $0x1c] sm:$0xf]
  %v61 = vld [vmem:[%s0 + $0x20] sm:$0xf]
  %v62 = vld [vmem:[%s0 + $0x24] sm:$0xf]
  %v63 = vld [vmem:[%s0 + $0x28] sm:$0xf]
  %v64 = vld [vmem:[%s0 + $0x2c] sm:$0xf]
  %v65 = vld [vmem:[%s0 + $0x30] sm:$0xf]
  %v66 = vld [vmem:[%s0 + $0x34] sm:$0xf]
  %v67 = vld [vmem:[%s0 + $0x38] sm:$0xf]
  %v68 = vld [vmem:[%s0 + $0x3c] sm:$0xf]
  %v69 = vld [vmem:[%s1] sm:$0xf]
  %v70 = vld [vmem:[%s1 + $0x4] sm:$0xf]
  %v71 = vld [vmem:[%s1 + $0x8] sm:$0xf]
  %v72 = vld [vmem:[%s1 + $0xc] sm:$0xf]
  %v73 = vld [vmem:[%s1 + $0x10] sm:$0xf]
  %v74 = vld [vmem:[%s1 + $0x14] sm:$0xf]
  %v75 = vld [vmem:[%s1 + $0x18] sm:$0xf]
  %v76 = vld [vmem:[%s1 + $0x1c] sm:$0xf]
  %v77 = vld [vmem:[%s1 + $0x20] sm:$0xf]
  %v78 = vld [vmem:[%s1 + $0x24] sm:$0xf]
  %v79 = vld [vmem:[%s1 + $0x28] sm:$0xf]
  %v80 = vld [vmem:[%s1 + $0x2c] sm:$0xf]
  %v81 = vld [vmem:[%s1 + $0x30] sm:$0xf]
  %v82 = vld [vmem:[%s1 + $0x34] sm:$0xf]
  %v83 = vld [vmem:[%s1 + $0x38] sm:$0xf]
  %v84 = vld [vmem:[%s1 + $0x3c] sm:$0xf]
  %v101 = vunpack.c.l.b16 %v53
  %v102 = vunpack.c.l.b16 %v54
  %v103 = vunpack.c.l.b16 %v55
  %v104 = vunpack.c.l.b16 %v56
  %v105 = vunpack.c.l.b16 %v57
  %v106 = vunpack.c.l.b16 %v58
  %v107 = vunpack.c.l.b16 %v59
  %v108 = vunpack.c.l.b16 %v60
  %v109 = vunpack.c.l.b16 %v61
  %v110 = vunpack.c.l.b16 %v62
  %v111 = vunpack.c.l.b16 %v63
  %v112 = vunpack.c.l.b16 %v64
  %v113 = vunpack.c.l.b16 %v65
  %v114 = vunpack.c.l.b16 %v66
  %v115 = vunpack.c.l.b16 %v67
  %v116 = vunpack.c.l.b16 %v68
  %v117 = vpack.c.b16 %v102, %v101
  %v118 = vpack.c.b16 %v104, %v103
  %v119 = vpack.c.b16 %v106, %v105
  %v120 = vpack.c.b16 %v108, %v107
  %v121 = vpack.c.b16 %v110, %v109
  %v122 = vpack.c.b16 %v112, %v111
  %v123 = vpack.c.b16 %v114, %v113
  %v124 = vpack.c.b16 %v116, %v115
  %v149 = vunpack.c.l.b16 %v69
  %v150 = vunpack.c.l.b16 %v70
  %v151 = vunpack.c.l.b16 %v71
  %v152 = vunpack.c.l.b16 %v72
  %v153 = vunpack.c.l.b16 %v73
  %v154 = vunpack.c.l.b16 %v74
  %v155 = vunpack.c.l.b16 %v75
  %v156 = vunpack.c.l.b16 %v76
  %v157 = vunpack.c.l.b16 %v77
  %v158 = vunpack.c.l.b16 %v78
  %v159 = vunpack.c.l.b16 %v79
  %v160 = vunpack.c.l.b16 %v80
  %v161 = vunpack.c.l.b16 %v81
  %v162 = vunpack.c.l.b16 %v82
  %v163 = vunpack.c.l.b16 %v83
  %v164 = vunpack.c.l.b16 %v84
  %v165 = vpack.c.b16 %v150, %v149
  %v166 = vpack.c.b16 %v152, %v151
  %v167 = vpack.c.b16 %v154, %v153
  %v168 = vpack.c.b16 %v156, %v155
  %v169 = vpack.c.b16 %v158, %v157
  %v170 = vpack.c.b16 %v160, %v159
  %v171 = vpack.c.b16 %v162, %v161
  %v172 = vpack.c.b16 %v164, %v163
  %181 = vmatpush.bf16.msra.mxu0 %v172
  %182 = vmatpush.bf16.msra.mxu0 %v171
  %183 = vmatpush.bf16.msra.mxu0 %v170
  %184 = vmatpush.bf16.msra.mxu0 %v169
  %185 = vmatpush.bf16.msra.mxu0 %v168
  %186 = vmatpush.bf16.msra.mxu0 %v167
  %187 = vmatpush.bf16.msra.mxu0 %v166
  %188 = vmatpush.bf16.msra.mxu0 %v165
  %189 = vmatmul.bf16.gmra.mxu0 %v117
  %v190 = vpop.f32.mrf.mxu0
  %v191 = vadd.f32 0.0, %v190
  %v192 = vpop.f32.mrf.mxu0
  %v193 = vadd.f32 0.0, %v192
  %194 = vmatmul.bf16.gmra.mxu0 %v118
  %v195 = vpop.f32.mrf.mxu0
  %v196 = vadd.f32 0.0, %v195
  %v197 = vpop.f32.mrf.mxu0
  %v198 = vadd.f32 0.0, %v197
  %199 = vmatmul.bf16.gmra.mxu0 %v119
  %v200 = vpop.f32.mrf.mxu0
  %v201 = vadd.f32 0.0, %v200
  %v202 = vpop.f32.mrf.mxu0
  %v203 = vadd.f32 0.0, %v202
  %204 = vmatmul.bf16.gmra.mxu0 %v120
  %v205 = vpop.f32.mrf.mxu0
  %v206 = vadd.f32 0.0, %v205
  %v207 = vpop.f32.mrf.mxu0
  %v208 = vadd.f32 0.0, %v207
  %209 = vmatmul.bf16.gmra.mxu0 %v121
  %v210 = vpop.f32.mrf.mxu0
  %v211 = vadd.f32 0.0, %v210
  %v212 = vpop.f32.mrf.mxu0
  %v213 = vadd.f32 0.0, %v212
  %214 = vmatmul.bf16.gmra.mxu0 %v122
  %v215 = vpop.f32.mrf.mxu0
  %v216 = vadd.f32 0.0, %v215
  %v217 = vpop.f32.mrf.mxu0
  %v218 = vadd.f32 0.0, %v217
  %219 = vmatmul.bf16.gmra.mxu0 %v123
  %v220 = vpop.f32.mrf.mxu0
  %v221 = vadd.f32 0.0, %v220
  %v222 = vpop.f32.mrf.mxu0
  %v223 = vadd.f32 0.0, %v222
  %224 = vmatmul.bf16.gmra.mxu0 %v124
  %v225 = vpop.f32.mrf.mxu0
  %v226 = vadd.f32 0.0, %v225
  %v227 = vpop.f32.mrf.mxu0
  %v228 = vadd.f32 0.0, %v227
  %229 = vdwg.mxu0
  %v230 = vadd.f32 %v37, %v191
  %v231 = vadd.f32 %v38, %v193
  %v232 = vadd.f32 %v39, %v196
  %v233 = vadd.f32 %v40, %v198
  %v234 = vadd.f32 %v41, %v201
  %v235 = vadd.f32 %v42, %v203
  %v236 = vadd.f32 %v43, %v206
  %v237 = vadd.f32 %v44, %v208
  %v238 = vadd.f32 %v45, %v211
  %v239 = vadd.f32 %v46, %v213
  %v240 = vadd.f32 %v47, %v216
  %v241 = vadd.f32 %v48, %v218
  %v242 = vadd.f32 %v49, %v221
  %v243 = vadd.f32 %v50, %v223
  %v244 = vadd.f32 %v51, %v226
  %v245 = vadd.f32 %v52, %v228
  %246 = vst [vmem:[#allocation2] sm:$0xff] %v230
  %247 = vst [vmem:[#allocation2 + $0x8] sm:$0xff] %v231
  %248 = vst [vmem:[#allocation2 + $0x10] sm:$0xff] %v232
  %249 = vst [vmem:[#allocation2 + $0x18] sm:$0xff] %v233
  %250 = vst [vmem:[#allocation2 + $0x20] sm:$0xff] %v234
  %251 = vst [vmem:[#allocation2 + $0x28] sm:$0xff] %v235
  %252 = vst [vmem:[#allocation2 + $0x30] sm:$0xff] %v236
  %253 = vst [vmem:[#allocation2 + $0x38] sm:$0xff] %v237
  %254 = vst [vmem:[#allocation2 + $0x40] sm:$0xff] %v238
  %255 = vst [vmem:[#allocation2 + $0x48] sm:$0xff] %v239
  %256 = vst [vmem:[#allocation2 + $0x50] sm:$0xff] %v240
  %257 = vst [vmem:[#allocation2 + $0x58] sm:$0xff] %v241
  %258 = vst [vmem:[#allocation2 + $0x60] sm:$0xff] %v242
  %259 = vst [vmem:[#allocation2 + $0x68] sm:$0xff] %v243
  %260 = vst [vmem:[#allocation2 + $0x70] sm:$0xff] %v244
  %261 = vst [vmem:[#allocation2 + $0x78] sm:$0xff] %v245
  // Predicated region
  $region22: #{_encoder_apply.3} parent=0 // pred_check
    %p262 = pneg %p17
  $region23: #{_encoder_apply.3} parent=0 // pred_check_branch
    %264 = sbr.rel (%p262) target = $region25
  $region24: #{_encoder_apply.3} parent=0 // pred_region
    %v265 = vld [vmem:[#allocation2] sm:$0xff]
    %v266 = vld [vmem:[#allocation2 + $0x8] sm:$0xff]
    %v267 = vld [vmem:[#allocation2 + $0x10] sm:$0xff]
    %v268 = vld [vmem:[#allocation2 + $0x18] sm:$0xff]
    %v269 = vld [vmem:[#allocation2 + $0x20] sm:$0xff]
    %v270 = vld [vmem:[#allocation2 + $0x28] sm:$0xff]
    %v271 = vld [vmem:[#allocation2 + $0x30] sm:$0xff]
    %v272 = vld [vmem:[#allocation2 + $0x38] sm:$0xff]
    %v273 = vld [vmem:[#allocation2 + $0x40] sm:$0xff]
    %v274 = vld [vmem:[#allocation2 + $0x48] sm:$0xff]
    %v275 = vld [vmem:[#allocation2 + $0x50] sm:$0xff]
    %v276 = vld [vmem:[#allocation2 + $0x58] sm:$0xff]
    %v277 = vld [vmem:[#allocation2 + $0x60] sm:$0xff]
    %v278 = vld [vmem:[#allocation2 + $0x68] sm:$0xff]
    %v279 = vld [vmem:[#allocation2 + $0x70] sm:$0xff]
    %v280 = vld [vmem:[#allocation2 + $0x78] sm:$0xff]
    %v281 = vld [vmem:[%s2] sm:$0x1]
    %v283 = vperm.slane %v281, 0
    %v285 = vadd.f32 %v265, %v283
    %v286 = vadd.f32 %v266, %v283
    %v287 = vadd.f32 %v267, %v283
    %v288 = vadd.f32 %v268, %v283
    %v289 = vadd.f32 %v269, %v283
    %v290 = vadd.f32 %v270, %v283
    %v291 = vadd.f32 %v271, %v283
    %v292 = vadd.f32 %v272, %v283
    %v293 = vadd.f32 %v273, %v283
    %v294 = vadd.f32 %v274, %v283
    %v295 = vadd.f32 %v275, %v283
    %v296 = vadd.f32 %v276, %v283
    %v297 = vadd.f32 %v277, %v283
    %v298 = vadd.f32 %v278, %v283
    %v299 = vadd.f32 %v279, %v283
    %v300 = vadd.f32 %v280, %v283
    %vm301 = vcmp.ge.f32.partialorder %v285, 0.0
    %vm302 = vcmp.ge.f32.partialorder %v286, 0.0
    %vm303 = vcmp.ge.f32.partialorder %v287, 0.0
    %vm304 = vcmp.ge.f32.partialorder %v288, 0.0
    %vm305 = vcmp.ge.f32.partialorder %v289, 0.0
    %vm306 = vcmp.ge.f32.partialorder %v290, 0.0
    %vm307 = vcmp.ge.f32.partialorder %v291, 0.0
    %vm308 = vcmp.ge.f32.partialorder %v292, 0.0
    %vm309 = vcmp.ge.f32.partialorder %v293, 0.0
    %vm310 = vcmp.ge.f32.partialorder %v294, 0.0
    %vm311 = vcmp.ge.f32.partialorder %v295, 0.0
    %vm312 = vcmp.ge.f32.partialorder %v296, 0.0
    %vm313 = vcmp.ge.f32.partialorder %v297, 0.0
    %vm314 = vcmp.ge.f32.partialorder %v298, 0.0
    %vm315 = vcmp.ge.f32.partialorder %v299, 0.0
    %vm316 = vcmp.ge.f32.partialorder %v300, 0.0
    %v317 = vld [vmem:[%s3] sm:$0x1]
    %v319 = vperm.slane %v317, 0
    %v321 = vmul.f32 %v319, %v285
    %v322 = vmul.f32 %v319, %v286
    %v323 = vmul.f32 %v319, %v287
    %v324 = vmul.f32 %v319, %v288
    %v325 = vmul.f32 %v319, %v289
    %v326 = vmul.f32 %v319, %v290
    %v327 = vmul.f32 %v319, %v291
    %v328 = vmul.f32 %v319, %v292
    %v329 = vmul.f32 %v319, %v293
    %v330 = vmul.f32 %v319, %v294
    %v331 = vmul.f32 %v319, %v295
    %v332 = vmul.f32 %v319, %v296
    %v333 = vmul.f32 %v319, %v297
    %v334 = vmul.f32 %v319, %v298
    %v335 = vmul.f32 %v319, %v299
    %v336 = vmul.f32 %v319, %v300
    %v337 = vsel %vm301, %v285, %v321
    %v338 = vsel %vm302, %v286, %v322
    %v339 = vsel %vm303, %v287, %v323
    %v340 = vsel %vm304, %v288, %v324
    %v341 = vsel %vm305, %v289, %v325
    %v342 = vsel %vm306, %v290, %v326
    %v343 = vsel %vm307, %v291, %v327
    %v344 = vsel %vm308, %v292, %v328
    %v345 = vsel %vm309, %v293, %v329
    %v346 = vsel %vm310, %v294, %v330
    %v347 = vsel %vm311, %v295, %v331
    %v348 = vsel %vm312, %v296, %v332
    %v349 = vsel %vm313, %v297, %v333
    %v350 = vsel %vm314, %v298, %v334
    %v351 = vsel %vm315, %v299, %v335
    %v352 = vsel %vm316, %v300, %v336
    %353 = vst [vmem:[%s4] sm:$0xff] %v337
    %354 = vst [vmem:[%s4 + $0x8] sm:$0xff] %v338
    %355 = vst [vmem:[%s4 + $0x10] sm:$0xff] %v339
    %356 = vst [vmem:[%s4 + $0x18] sm:$0xff] %v340
    %357 = vst [vmem:[%s4 + $0x20] sm:$0xff] %v341
    %358 = vst [vmem:[%s4 + $0x28] sm:$0xff] %v342
    %359 = vst [vmem:[%s4 + $0x30] sm:$0xff] %v343
    %360 = vst [vmem:[%s4 + $0x38] sm:$0xff] %v344
    %361 = vst [vmem:[%s4 + $0x40] sm:$0xff] %v345
    %362 = vst [vmem:[%s4 + $0x48] sm:$0xff] %v346
    %363 = vst [vmem:[%s4 + $0x50] sm:$0xff] %v347
    %364 = vst [vmem:[%s4 + $0x58] sm:$0xff] %v348
    %365 = vst [vmem:[%s4 + $0x60] sm:$0xff] %v349
    %366 = vst [vmem:[%s4 + $0x68] sm:$0xff] %v350
    %367 = vst [vmem:[%s4 + $0x70] sm:$0xff] %v351
    %368 = vst [vmem:[%s4 + $0x78] sm:$0xff] %v352
  $region25: #{_encoder_apply.3} parent=0 // pred_fallthru
    _
  // Predicated region
  $region26: #{_encoder_apply.3} parent=0 // pred_check
    _
  $region27: #{_encoder_apply.3} parent=0 // pred_check_branch
    %370 = sbr.rel (0) target = $region29
  $region28: #{_encoder_apply.3} parent=0 // pred_region
    _
  $region29: #{_encoder_apply.3} parent=0 // pred_fallthru
    _
  // Predicated region
  $region30: #{_encoder_apply.3} parent=0 // pred_check
    _
  $region31: #{_encoder_apply.3} parent=0 // pred_check_branch
    %372 = sbr.rel (0) target = $region33
  $region32: #{_encoder_apply.3} parent=0 // pred_region
    _
  $region33: #{_encoder_apply.3} parent=0 // pred_fallthru
    _

</llo_original>
